<compile_context>
chip_gen: v7x
topology: tpu7x:2x2x1
jax: 0.10.0
libtpu: 0.0.40
codegen_flags: <defaults>
</compile_context>

<pallas_src>
import math

import jax
import jax.numpy as jnp
from jax.experimental import pallas as pl
from jax.experimental.pallas import tpu as pltpu

LANE = 128
SUBLANE = 8


def _round_up(x, m):
    return ((x + m - 1) // m) * m


def _pad2d(a, rows, cols, dtype):
    out = jnp.zeros((rows, cols), dtype)
    return out.at[: a.shape[0], : a.shape[1]].set(a.astype(dtype))


def _num_tensorcores():
    """Best-effort TensorCore count (used only to decide grid splitting)."""
    try:
        dev = jax.devices()[0]
        kind = (getattr(dev, "device_kind", "") or "").lower()
        if "v7" in kind:
            return 2
        nc = getattr(dev, "num_cores", None)
        return int(nc) if nc else 1
    except Exception:  # pragma: no cover - detection is purely advisory
        return 1


def _pick_batch_tile(B, batch_tile, num_cores):
    """One big tile when the batch fits (v5e/v6e); >=num_cores tiles otherwise."""
    B_su = _round_up(max(B, 1), SUBLANE)
    cap = max(SUBLANE, _round_up(batch_tile, SUBLANE))
    if num_cores > 1 and B_su >= num_cores * SUBLANE:
        tb = min(cap, _round_up(-(-B_su // num_cores), SUBLANE))
    else:
        tb = min(cap, B_su)
    tb = max(SUBLANE, tb)
    b_pad = _round_up(B, tb)
    return tb, b_pad


def _vmem_and_cost(TB, Ip, Hp, Op, cdt, steps, B_pad):
    """Honest VMEM estimate (weights counted double-buffered) + cost hint."""
    wbytes = jnp.dtype(cdt).itemsize
    abytes = wbytes                                  # streamed activations = compute dtype
    est = (2 * ((Ip + Hp) * 4 * Hp + Hp * Op) * wbytes   # weights (double-buffered)
           + 2 * (4 * Hp + Op) * 4                        # biases (f32)
           + 2 * TB * (Ip * abytes + Hp * 4)              # x (cdt) + h0/h (f32) in
           + 2 * TB * (Op * abytes + Hp * 4)              # u + h outputs
           + TB * (Ip + Hp) * wbytes                      # in-kernel [x|h] concat
           + TB * 4 * Hp * 4                              # fused gate pre-activations
           + 5 * TB * Hp * 4)                             # r/z/n/h_new temporaries
    vmem_limit = int(min(32 << 20, max(8 << 20, 2 * est)))   # < v7x's 64 MiB physical
    flops = steps * (2 * B_pad * (Ip + Hp) * 4 * Hp + 2 * B_pad * Hp * Op)
    transc = steps * B_pad * (3 * Hp + Op)
    bytes_accessed = int(steps * B_pad * (Ip + Op) * abytes      # x in, u out
                         + 2 * B_pad * Hp * 4                    # h0 in, h out
                         + ((Ip + Hp) * 4 * Hp + Hp * Op) * wbytes
                         + (4 * Hp + Op) * 4)
    cost = pl.CostEstimate(flops=int(flops), transcendentals=int(transc),
                           bytes_accessed=bytes_accessed)
    return vmem_limit, cost


# ----------------------------------------------------------------------------
# Kernels.  All feature dims are lane-padded (multiples of 128) at init time,
# so every gate slice below is 128-aligned and both outputs are lane-dense.
# ----------------------------------------------------------------------------
def _gru_step_math(x2d, h_prev, w_cat_ref, b_cat_ref, wfc_ref, bfc_ref):
    """One GRU step + fc + sigmoid.  x2d: (TB, Ip) compute dtype; h_prev: (TB, Hp) f32."""
    Hp = h_prev.shape[-1]
    cdt = w_cat_ref.dtype

    # Single fused projection: [x | h] @ [r_sum | z_sum | i_n | h_n], f32 acc.
    xh = jnp.concatenate([x2d.astype(cdt), h_prev.astype(cdt)], axis=-1)
    g = jnp.dot(xh, w_cat_ref[...], preferred_element_type=jnp.float32) + b_cat_ref[...]

    # Gate math in f32 (v5e VPU/EUP have no bf16).
    r = jax.nn.sigmoid(g[:, 0:Hp])
    z = jax.nn.sigmoid(g[:, Hp:2 * Hp])
    n = jnp.tanh(g[:, 2 * Hp:3 * Hp] + r * g[:, 3 * Hp:4 * Hp])
    h_new = (1.0 - z) * n + z * h_prev                    # (TB, Hp) f32

    logits = jnp.dot(h_new.astype(cdt), wfc_ref[...],
                     preferred_element_type=jnp.float32) + bfc_ref[...]
    return jax.nn.sigmoid(logits), h_new


def _policy_gru_step_kernel(x_ref, h0_ref, w_cat_ref, b_cat_ref, wfc_ref, bfc_ref,
                            u_ref, h_ref):
    u, h_new = _gru_step_math(x_ref[...], h0_ref[...],
                              w_cat_ref, b_cat_ref, wfc_ref, bfc_ref)
    u_ref[...] = u.astype(u_ref.dtype)
    h_ref[...] = h_new


def _policy_gru_rollout_kernel(x_ref, h0_ref, w_cat_ref, b_cat_ref, wfc_ref, bfc_ref,
                               u_ref, h_ref):
    t = pl.program_id(1)

    # h is carried in the resident output block (constant block index over t).
    @pl.when(t == 0)
    def _():
        h_ref[...] = h0_ref[...]

    u, h_new = _gru_step_math(x_ref[0], h_ref[...],
                              w_cat_ref, b_cat_ref, wfc_ref, bfc_ref)
    u_ref[0] = u.astype(u_ref.dtype)
    h_ref[...] = h_new


# ----------------------------------------------------------------------------
# Wrappers.
# ----------------------------------------------------------------------------
def policy_gru_forward(x, h0, params, *, batch_tile=512, num_cores=None):
    """Single-step PolicyGRU forward.  x: (B, I) f32; h0: (1, B, H) f32.
    Returns (u (B, O) f32, h (1, B, H) f32) — matches the torch module."""
    B = x.shape[0]
    H, O = params["hidden_dim"], params["output_dim"]
    w_cat, w_fc = params["w_cat"], params["w_fc_t"]
    Hp = w_fc.shape[0]
    Ip = w_cat.shape[0] - Hp
    Op = w_fc.shape[1]
    cdt = w_cat.dtype

    if num_cores is None:
        num_cores = _num_tensorcores()
    TB, B_pad = _pick_batch_tile(B, batch_tile, num_cores)

    x_p = _pad2d(x, B_pad, Ip, cdt)                 # activations stream in compute dtype
    h0_p = _pad2d(h0[0], B_pad, Hp, jnp.float32)    # hidden state stays f32

    vmem_limit, cost = _vmem_and_cost(TB, Ip, Hp, Op, cdt, 1, B_pad)

    rows = lambda cols: pl.BlockSpec((TB, cols), lambda b: (b, 0))   # per-tile
    const = lambda shape: pl.BlockSpec(shape, lambda b: (0, 0))      # resident

    u_p, h_p = pl.pallas_call(
        _policy_gru_step_kernel,
        grid=(B_pad // TB,),
        out_shape=(
            jax.ShapeDtypeStruct((B_pad, Op), cdt),          # u in compute dtype
            jax.ShapeDtypeStruct((B_pad, Hp), jnp.float32),  # h state in f32
        ),
        in_specs=[
            rows(Ip),                   # x tile
            rows(Hp),                   # h0 tile (aliased to h output)
            const((Ip + Hp, 4 * Hp)),   # fused [x|h] -> [r|z|i_n|h_n] weights
            const((1, 4 * Hp)),         # fused gate bias
            const((Hp, Op)),            # W_fc^T
            const((1, Op)),             # b_fc
        ],
        out_specs=(rows(Op), rows(Hp)),
        input_output_aliases={1: 1},    # keep h in one HBM buffer across steps
        compiler_params=pltpu.CompilerParams(
            dimension_semantics=("parallel",),
            vmem_limit_bytes=vmem_limit,
        ),
        cost_estimate=cost,
    )(x_p, h0_p, w_cat, params["b_cat"], w_fc, params["b_fc"])

    u = u_p[:B, :O].astype(jnp.float32)
    h = h_p[:B, :H]
    return u, h[None, :, :]


def policy_gru_rollout(xs, h0, params, *, batch_tile=512, num_cores=None):
    """Fused T-step rollout: equivalent to applying the module's forward T times,
    feeding h back each step.  xs: (T, B, I) f32; h0: (1, B, H) f32.
    Returns (us (T, B, O) f32, h (1, B, H) f32)."""
    T, B, I_in = xs.shape
    H, O = params["hidden_dim"], params["output_dim"]
    w_cat, w_fc = params["w_cat"], params["w_fc_t"]
    Hp = w_fc.shape[0]
    Ip = w_cat.shape[0] - Hp
    Op = w_fc.shape[1]
    cdt = w_cat.dtype

    if num_cores is None:
        num_cores = _num_tensorcores()
    TB, B_pad = _pick_batch_tile(B, batch_tile, num_cores)

    xs_p = jnp.zeros((T, B_pad, Ip), cdt).at[:, :B, :I_in].set(xs.astype(cdt))
    h0_p = _pad2d(h0[0], B_pad, Hp, jnp.float32)

    vmem_limit, cost = _vmem_and_cost(TB, Ip, Hp, Op, cdt, T, B_pad)

    us_p, h_p = pl.pallas_call(
        _policy_gru_rollout_kernel,
        grid=(B_pad // TB, T),          # batch "parallel", time "arbitrary" (carried)
        out_shape=(
            jax.ShapeDtypeStruct((T, B_pad, Op), cdt),
            jax.ShapeDtypeStruct((B_pad, Hp), jnp.float32),
        ),
        in_specs=[
            pl.BlockSpec((1, TB, Ip), lambda b, t: (t, b, 0)),     # x_t tile
            pl.BlockSpec((TB, Hp), lambda b, t: (b, 0)),           # h0 (read at t==0)
            pl.BlockSpec((Ip + Hp, 4 * Hp), lambda b, t: (0, 0)),  # weights: DMA'd once
            pl.BlockSpec((1, 4 * Hp), lambda b, t: (0, 0)),
            pl.BlockSpec((Hp, Op), lambda b, t: (0, 0)),
            pl.BlockSpec((1, Op), lambda b, t: (0, 0)),
        ],
        out_specs=(
            pl.BlockSpec((1, TB, Op), lambda b, t: (t, b, 0)),     # per-step u
            pl.BlockSpec((TB, Hp), lambda b, t: (b, 0)),           # carried h (resident)
        ),
        compiler_params=pltpu.CompilerParams(
            dimension_semantics=("parallel", "arbitrary"),
            vmem_limit_bytes=vmem_limit,
        ),
        cost_estimate=cost,
    )(xs_p, h0_p, w_cat, params["b_cat"], w_fc, params["b_fc"])

    us = us_p[:, :B, :O].astype(jnp.float32)
    h = h_p[:B, :H]
    return us, h[None, :, :]


# ----------------------------------------------------------------------------
# Deterministic parameter init (mirrors the module's __init__): xavier W_ih,
# orthogonal W_hh, zero GRU biases, xavier fc, fc.bias = -5.  Weights are
# pre-transposed, gate-fused and lane-padded once.  Zero padding is exact:
# padded hidden columns stay identically 0 through the recurrence.
# ----------------------------------------------------------------------------
def init_policy_gru_params(key, input_dim, hidden_dim, output_dim,
                           param_dtype=jnp.bfloat16):
    k1, k2, k3 = jax.random.split(key, 3)
    I, H, O = input_dim, hidden_dim, output_dim
    Ip, Hp, Op = _round_up(I, LANE), _round_up(H, LANE), _round_up(O, LANE)

    # gru.weight_ih_l0 : (3H, I), xavier_uniform
    lim = math.sqrt(6.0 / (I + 3 * H))
    w_ih = jax.random.uniform(k1, (3 * H, I), minval=-lim, maxval=lim,
                              dtype=jnp.float32)
    # gru.weight_hh_l0 : (3H, H), orthogonal
    a = jax.random.normal(k2, (3 * H, H), dtype=jnp.float32)
    q, r_ = jnp.linalg.qr(a)
    w_hh = q * jnp.sign(jnp.diagonal(r_))
    # fc.weight : (O, H), xavier_uniform ; fc.bias = -5 ; GRU biases = 0
    lim_fc = math.sqrt(6.0 / (H + O))
    w_fc = jax.random.uniform(k3, (O, H), minval=-lim_fc, maxval=lim_fc,
                              dtype=jnp.float32)
    b_ih = jnp.zeros((3 * H,), jnp.float32)
    b_hh = jnp.zeros((3 * H,), jnp.float32)

    # Fused weight: rows = [input (Ip) | hidden (Hp)], cols = [r | z | i_n | h_n].
    # r/z gates pre-sum input+hidden projections; n-gate blocks stay separate so
    # torch's n = tanh(i_n + r*(W_hn h + b_hn)) is preserved exactly.
    w_ih_t, w_hh_t = w_ih.T, w_hh.T                       # (I, 3H), (H, 3H)
    w_cat = jnp.zeros((Ip + Hp, 4 * Hp), jnp.float32)
    for g in range(2):                                    # r, z
        w_cat = w_cat.at[:I, g * Hp:g * Hp + H].set(w_ih_t[:, g * H:(g + 1) * H])
        w_cat = w_cat.at[Ip:Ip + H, g * Hp:g * Hp + H].set(w_hh_t[:, g * H:(g + 1) * H])
    w_cat = w_cat.at[:I, 2 * Hp:2 * Hp + H].set(w_ih_t[:, 2 * H:3 * H])       # i_n
    w_cat = w_cat.at[Ip:Ip + H, 3 * Hp:3 * Hp + H].set(w_hh_t[:, 2 * H:3 * H])  # h_n
    w_cat = w_cat.astype(param_dtype)

    b_cat = jnp.zeros((1, 4 * Hp), jnp.float32)
    b_cat = b_cat.at[0, 0:H].set(b_ih[0:H] + b_hh[0:H])
    b_cat = b_cat.at[0, Hp:Hp + H].set(b_ih[H:2 * H] + b_hh[H:2 * H])
    b_cat = b_cat.at[0, 2 * Hp:2 * Hp + H].set(b_ih[2 * H:3 * H])
    b_cat = b_cat.at[0, 3 * Hp:3 * Hp + H].set(b_hh[2 * H:3 * H])

    w_fc_t = (jnp.zeros((Hp, Op), jnp.float32)
              .at[:H, :O].set(w_fc.T).astype(param_dtype))
    b_fc = jnp.zeros((1, Op), jnp.float32).at[0, :O].set(-5.0)

    return {
        "input_dim": I, "hidden_dim": H, "output_dim": O,
        "w_cat": w_cat, "b_cat": b_cat, "w_fc_t": w_fc_t, "b_fc": b_fc,
    }


# ----------------------------------------------------------------------------
# Pure-JAX reference (same padded/fused weights, torch GRU single-step math).
# ----------------------------------------------------------------------------
def reference_forward(x, h0, params):
    H, O = params["hidden_dim"], params["output_dim"]
    w_cat, w_fc = params["w_cat"], params["w_fc_t"]
    Hp = w_fc.shape[0]
    Ip = w_cat.shape[0] - Hp
    cdt = w_cat.dtype
    hi = jax.lax.Precision.HIGHEST

    B = x.shape[0]
    xp = _pad2d(x, B, Ip, cdt)
    hp = _pad2d(h0[0], B, Hp, jnp.float32)
    xh = jnp.concatenate([xp, hp.astype(cdt)], axis=-1)
    g = jnp.dot(xh, w_cat, preferred_element_type=jnp.float32,
                precision=hi) + params["b_cat"]
    r = jax.nn.sigmoid(g[:, :Hp])
    z = jax.nn.sigmoid(g[:, Hp:2 * Hp])
    n = jnp.tanh(g[:, 2 * Hp:3 * Hp] + r * g[:, 3 * Hp:4 * Hp])
    h_new = (1.0 - z) * n + z * hp
    logits = jnp.dot(h_new.astype(cdt), w_fc, preferred_element_type=jnp.float32,
                     precision=hi) + params["b_fc"]
    u = jax.nn.sigmoid(logits).astype(cdt).astype(jnp.float32)
    return u[:, :O], h_new[:, :H][None]


if __name__ == "__main__":
    batch, input_dim, hidden_dim, output_dim, T = 2, 16, 32, 8, 5

    key = jax.random.PRNGKey(0)
    kp, kx, ks = jax.random.split(key, 3)

    x = jax.random.normal(kx, (batch, input_dim), dtype=jnp.float32)
    xs = jax.random.normal(ks, (T, batch, input_dim), dtype=jnp.float32)
    h0 = jnp.zeros((1, batch, hidden_dim), jnp.float32)   # init_hidden()

    # ---- f32 weights: check against the XLA reference -----------------------
    # (tolerance covers Mosaic-vs-XLA f32 matmul pass-precision differences)
    p32 = init_policy_gru_params(kp, input_dim, hidden_dim, output_dim,
                                 param_dtype=jnp.float32)
    step32 = jax.jit(lambda x_, h_: policy_gru_forward(x_, h_, p32))
    u, h = jax.block_until_ready(step32(x, h0))
    u_ref, h_ref = reference_forward(x, h0, p32)
    assert u.shape == (batch, output_dim) and h.shape == (1, batch, hidden_dim)
    assert jnp.allclose(u, u_ref, atol=2e-3, rtol=2e-3), float(jnp.abs(u - u_ref).max())
    assert jnp.allclose(h, h_ref, atol=2e-3, rtol=2e-3), float(jnp.abs(h - h_ref).max())

    # ---- bf16 weights/activations (recommended on v6e/v7x) ------------------
    p16 = init_policy_gru_params(kp, input_dim, hidden_dim, output_dim,
                                 param_dtype=jnp.bfloat16)
    step16 = jax.jit(lambda x_, h_: policy_gru_forward(x_, h_, p16))
    u_b, h_b = jax.block_until_ready(step16(x, h0))
    u_rb, h_rb = reference_forward(x, h0, p16)
    assert jnp.allclose(u_b, u_rb, atol=2e-3, rtol=2e-2), float(jnp.abs(u_b - u_rb).max())
    assert jnp.allclose(h_b, h_rb, atol=2e-3, rtol=2e-2), float(jnp.abs(h_b - h_rb).max())

    # ---- fused T-step rollout vs. T single-step kernel calls ----------------
    roll32 = jax.jit(lambda xs_, h_: policy_gru_rollout(xs_, h_, p32))
    us, h_T = jax.block_until_ready(roll32(xs, h0))
    assert us.shape == (T, batch, output_dim)
    h_it = h0
    for t in range(T):
        u_t, h_it = step32(xs[t], h_it)
        assert jnp.allclose(us[t], u_t, atol=1e-5, rtol=1e-5), \
            float(jnp.abs(us[t] - u_t).max())
    assert jnp.allclose(h_T, h_it, atol=1e-5, rtol=1e-5), float(jnp.abs(h_T - h_it).max())

    print("KERNEL_OK")
</pallas_src>

<mosaic_0001>
module attributes {stable_mosaic.version = 11 : i64} {
  func.func @_policy_gru_step_kernel(%arg0: i32, %arg1: memref<8x128xf32, #tpu.memory_space<vmem>>, %arg2: memref<8x128xf32, #tpu.memory_space<vmem>>, %arg3: memref<256x512xf32, #tpu.memory_space<vmem>>, %arg4: memref<1x512xf32, #tpu.memory_space<vmem>>, %arg5: memref<128x128xf32, #tpu.memory_space<vmem>>, %arg6: memref<1x128xf32, #tpu.memory_space<vmem>>, %arg7: memref<8x128xf32, #tpu.memory_space<vmem>>, %arg8: memref<8x128xf32, #tpu.memory_space<vmem>>) attributes {dimension_semantics = [#tpu.dimension_semantics<parallel>], iteration_bounds = array<i64: 1>, scalar_prefetch = 0 : i64, scratch_operands = 0 : i64, tpu.core_type = #tpu.core_type<tc>, window_params = [{transform_indices = @transform_0, window_bounds = array<i64: 8, 128>}, {transform_indices = @transform_1, window_bounds = array<i64: 8, 128>}, {pipeline_mode = #tpu.pipeline_mode<synchronous>, transform_indices = @transform_2, window_bounds = array<i64: 256, 512>}, {pipeline_mode = #tpu.pipeline_mode<synchronous>, transform_indices = @transform_3, window_bounds = array<i64: 1, 512>}, {pipeline_mode = #tpu.pipeline_mode<synchronous>, transform_indices = @transform_4, window_bounds = array<i64: 128, 128>}, {pipeline_mode = #tpu.pipeline_mode<synchronous>, transform_indices = @transform_5, window_bounds = array<i64: 1, 128>}, {transform_indices = @transform_6, window_bounds = array<i64: 8, 128>}, {transform_indices = @transform_7, window_bounds = array<i64: 8, 128>}]} {
    %c0 = arith.constant 0 : index
    %c0_0 = arith.constant 0 : index
    %0 = vector.load %arg1[%c0, %c0_0] : memref<8x128xf32, #tpu.memory_space<vmem>>, vector<8x128xf32>
    %c0_1 = arith.constant 0 : index
    %c0_2 = arith.constant 0 : index
    %1 = vector.load %arg2[%c0_1, %c0_2] : memref<8x128xf32, #tpu.memory_space<vmem>>, vector<8x128xf32>
    %2 = tpu.concatenate %0, %1 in 1 : vector<8x128xf32>, vector<8x128xf32> -> vector<8x256xf32>
    %c0_3 = arith.constant 0 : index
    %c0_4 = arith.constant 0 : index
    %3 = vector.load %arg3[%c0_3, %c0_4] : memref<256x512xf32, #tpu.memory_space<vmem>>, vector<256x512xf32>
    %cst = arith.constant dense<0.000000e+00> : vector<8x512xf32>
    %4 = tpu.matmul %2, %3, %cst {dimension_numbers = #tpu.dot_dimension_numbers<[1], [0], [0], [1], [0, 0, 1, 1], [], []>} : vector<8x256xf32>, vector<256x512xf32>, vector<8x512xf32> -> vector<8x512xf32>
    %c0_5 = arith.constant 0 : index
    %c0_6 = arith.constant 0 : index
    %5 = vector.load %arg4[%c0_5, %c0_6] : memref<1x512xf32, #tpu.memory_space<vmem>>, vector<1x512xf32>
    %6 = vector.broadcast %5 : vector<1x512xf32> to vector<8x512xf32>
    %7 = arith.addf %4, %6 : vector<8x512xf32>
    %8 = vector.extract_strided_slice %7 {offsets = [0, 0], sizes = [8, 128], strides = [1, 1]} : vector<8x512xf32> to vector<8x128xf32>
    %9 = arith.negf %8 : vector<8x128xf32>
    %10 = math.exp %9 : vector<8x128xf32>
    %cst_7 = arith.constant 1.000000e+00 : f32
    %11 = vector.broadcast %cst_7 : f32 to vector<8x128xf32>
    %12 = arith.addf %11, %10 : vector<8x128xf32>
    %13 = arith.divf %11, %12 : vector<8x128xf32>
    %14 = vector.extract_strided_slice %7 {offsets = [0, 128], sizes = [8, 128], strides = [1, 1]} : vector<8x512xf32> to vector<8x128xf32>
    %15 = arith.negf %14 : vector<8x128xf32>
    %16 = math.exp %15 : vector<8x128xf32>
    %cst_8 = arith.constant 1.000000e+00 : f32
    %17 = vector.broadcast %cst_8 : f32 to vector<8x128xf32>
    %18 = arith.addf %17, %16 : vector<8x128xf32>
    %19 = arith.divf %17, %18 : vector<8x128xf32>
    %20 = vector.extract_strided_slice %7 {offsets = [0, 256], sizes = [8, 128], strides = [1, 1]} : vector<8x512xf32> to vector<8x128xf32>
    %21 = vector.extract_strided_slice %7 {offsets = [0, 384], sizes = [8, 128], strides = [1, 1]} : vector<8x512xf32> to vector<8x128xf32>
    %22 = arith.mulf %13, %21 : vector<8x128xf32>
    %23 = arith.addf %20, %22 : vector<8x128xf32>
    %24 = math.tanh %23 : vector<8x128xf32>
    %cst_9 = arith.constant 1.000000e+00 : f32
    %25 = vector.broadcast %cst_9 : f32 to vector<8x128xf32>
    %26 = arith.subf %25, %19 : vector<8x128xf32>
    %27 = arith.mulf %26, %24 : vector<8x128xf32>
    %28 = arith.mulf %19, %1 : vector<8x128xf32>
    %29 = arith.addf %27, %28 : vector<8x128xf32>
    %c0_10 = arith.constant 0 : index
    %c0_11 = arith.constant 0 : index
    %30 = vector.load %arg5[%c0_10, %c0_11] : memref<128x128xf32, #tpu.memory_space<vmem>>, vector<128x128xf32>
    %cst_12 = arith.constant dense<0.000000e+00> : vector<8x128xf32>
    %31 = tpu.matmul %29, %30, %cst_12 {dimension_numbers = #tpu.dot_dimension_numbers<[1], [0], [0], [1], [0, 0, 1, 1], [], []>} : vector<8x128xf32>, vector<128x128xf32>, vector<8x128xf32> -> vector<8x128xf32>
    %c0_13 = arith.constant 0 : index
    %c0_14 = arith.constant 0 : index
    %32 = vector.load %arg6[%c0_13, %c0_14] : memref<1x128xf32, #tpu.memory_space<vmem>>, vector<1x128xf32>
    %33 = vector.broadcast %32 : vector<1x128xf32> to vector<8x128xf32>
    %34 = arith.addf %31, %33 : vector<8x128xf32>
    %35 = arith.negf %34 : vector<8x128xf32>
    %36 = math.exp %35 : vector<8x128xf32>
    %cst_15 = arith.constant 1.000000e+00 : f32
    %37 = vector.broadcast %cst_15 : f32 to vector<8x128xf32>
    %38 = arith.addf %37, %36 : vector<8x128xf32>
    %39 = arith.divf %37, %38 : vector<8x128xf32>
    %c0_16 = arith.constant 0 : index
    %c0_17 = arith.constant 0 : index
    %40 = vector.load %arg7[%c0_16, %c0_17] : memref<8x128xf32, #tpu.memory_space<vmem>>, vector<8x128xf32>
    tpu.vector_store %arg7[%c0_16, %c0_17], %39 {strides = array<i32>} : memref<8x128xf32, #tpu.memory_space<vmem>>, vector<8x128xf32>,
    %c0_18 = arith.constant 0 : index
    %c0_19 = arith.constant 0 : index
    %41 = vector.load %arg8[%c0_18, %c0_19] : memref<8x128xf32, #tpu.memory_space<vmem>>, vector<8x128xf32>
    tpu.vector_store %arg8[%c0_18, %c0_19], %29 {strides = array<i32>} : memref<8x128xf32, #tpu.memory_space<vmem>>, vector<8x128xf32>,
    return
  }
  func.func @transform_0(%arg0: i32) -> (i32, i32) {
    %c0_i32 = arith.constant 0 : i32
    %c0_i32_0 = arith.constant 0 : i32
    return %arg0, %c0_i32 : i32, i32
  }
  func.func @transform_1(%arg0: i32) -> (i32, i32) {
    %c0_i32 = arith.constant 0 : i32
    %c0_i32_0 = arith.constant 0 : i32
    return %arg0, %c0_i32 : i32, i32
  }
  func.func @transform_2(%arg0: i32) -> (i32, i32) {
    %c0_i32 = arith.constant 0 : i32
    %c0_i32_0 = arith.constant 0 : i32
    %c0_i32_1 = arith.constant 0 : i32
    return %c0_i32, %c0_i32_0 : i32, i32
  }
  func.func @transform_3(%arg0: i32) -> (i32, i32) {
    %c0_i32 = arith.constant 0 : i32
    %c0_i32_0 = arith.constant 0 : i32
    %c0_i32_1 = arith.constant 0 : i32
    return %c0_i32, %c0_i32_0 : i32, i32
  }
  func.func @transform_4(%arg0: i32) -> (i32, i32) {
    %c0_i32 = arith.constant 0 : i32
    %c0_i32_0 = arith.constant 0 : i32
    %c0_i32_1 = arith.constant 0 : i32
    return %c0_i32, %c0_i32_0 : i32, i32
  }
  func.func @transform_5(%arg0: i32) -> (i32, i32) {
    %c0_i32 = arith.constant 0 : i32
    %c0_i32_0 = arith.constant 0 : i32
    %c0_i32_1 = arith.constant 0 : i32
    return %c0_i32, %c0_i32_0 : i32, i32
  }
  func.func @transform_6(%arg0: i32) -> (i32, i32) {
    %c0_i32 = arith.constant 0 : i32
    %c0_i32_0 = arith.constant 0 : i32
    return %arg0, %c0_i32 : i32, i32
  }
  func.func @transform_7(%arg0: i32) -> (i32, i32) {
    %c0_i32 = arith.constant 0 : i32
    %c0_i32_0 = arith.constant 0 : i32
    return %arg0, %c0_i32 : i32, i32
  }
}

</mosaic_0001>

<llo_original>
// kernel: _lambda_.1
$region0: #{_lambda_.1}
  #allocation0 [shape = 'u32[]', space=smem, size = 0x4, offset = 0x4, fixed_abs, tag = 'smem constant byte address 0x4 - core index']
  #allocation1 [shape = 'u32[144,128]{1,0:T(1,128)}', space=vmem, size = 0x12000, scoped, tag = 'internal scratch']
  %s0 = inlined_call_operand.vmem [shape: f32[8,128], index: 0, kind: input, shape index: {}]
  %s1 = inlined_call_operand.vmem [shape: f32[8,128], index: 1, kind: input, shape index: {}, may-alias: {1,7}]
  %s2 = inlined_call_operand.hbm [shape: f32[256,512], index: 2, kind: input, shape index: {}]
  %s3 = inlined_call_operand.vmem [shape: f32[1,512], index: 3, kind: input, shape index: {}]
  %s4 = inlined_call_operand.hbm [shape: f32[128,128], index: 4, kind: input, shape index: {}]
  %s5 = inlined_call_operand.vmem [shape: f32[1,128], index: 5, kind: input, shape index: {}]
  %s6 = inlined_call_operand.vmem [shape: f32[8,128], index: 6, kind: output, shape index: {0}]
  %s7 = inlined_call_operand.vmem [shape: f32[8,128], index: 7, kind: output, shape index: {1}, may-alias: {1,7}]
  %8 = xla_tuple %s6, %s7
  %s9 = sld [smem:[#allocation0]]
  $region50: #{_lambda_.1} parent=0
    _
  %s11 = ssub.s32 1, %s9
  %s12 = scalar_select 0, %s11, %s9
  $region1: #{_lambda_.1} parent=0
    #allocation2 [shape = 'u8[524288]{0}', space=vmem, size = 0x80000, scoped, tag = 'input window, operand 2, single buffered']
    #allocation3 [shape = 's32[1]{0}', space=sflag, size = 0x4, scoped, tag = 'scoped memory for _lambda_.1']
    #allocation4 [shape = 'u8[65536]{0}', space=vmem, size = 0x10000, scoped, tag = 'input window, operand 4, single buffered']
    #allocation5 [shape = 's32[1]{0}', space=sflag, size = 0x4, scoped, tag = 'scoped memory for _lambda_.1']
    %13 = vsyncpa [#allocation3], 0
    %14 = vsyncpa [#allocation5], 0
    // Predicated region
    $region2: #{_lambda_.1} parent=1 // pred_check
      _
    $region3: #{_lambda_.1} parent=1 // pred_check_branch
      %16 = sbr.rel (0) target = $region5
    $region4: #{_lambda_.1} parent=1 // pred_region
      _
    $region5: #{_lambda_.1} parent=1 // pred_fallthru
      _
    // Predicated region
    $region6: #{_lambda_.1} parent=1 // pred_check
      _
    $region7: #{_lambda_.1} parent=1 // pred_check_branch
      %18 = sbr.rel (0) target = $region9
    $region8: #{_lambda_.1} parent=1 // pred_region
      _
    $region9: #{_lambda_.1} parent=1 // pred_fallthru
      _
    // Predicated region
    $region10: #{_lambda_.1} parent=1 // pred_check
      _
    $region11: #{_lambda_.1} parent=1 // pred_check_branch
      %20 = sbr.rel (0) target = $region13
    $region12: #{_lambda_.1} parent=1 // pred_region
      %s22 = ssub.s32 16384, 16384
      %23 = vsyncadd [#allocation3], %s22
      %s24 = sshll.u32 [#allocation2], 4
      %s25 = int_to_ptr.vmem [resolvable:$true] %s24
      %30 = dma.hbm_to_vmem [thread:$0]  %s2, 16384, %s25, [#allocation3], 512, 512, 32
    $region13: #{_lambda_.1} parent=1 // pred_fallthru
      _
    // Predicated region
    $region14: #{_lambda_.1} parent=1 // pred_check
      _
    $region15: #{_lambda_.1} parent=1 // pred_check_branch
      %32 = sbr.rel (0) target = $region17
    $region16: #{_lambda_.1} parent=1 // pred_region
      _
    $region17: #{_lambda_.1} parent=1 // pred_fallthru
      _
    // Predicated region
    $region18: #{_lambda_.1} parent=1 // pred_check
      _
    $region19: #{_lambda_.1} parent=1 // pred_check_branch
      %34 = sbr.rel (0) target = $region21
    $region20: #{_lambda_.1} parent=1 // pred_region
      %s36 = ssub.s32 2048, 2048
      %37 = vsyncadd [#allocation5], %s36
      %s38 = sshll.u32 [#allocation4], 4
      %s39 = int_to_ptr.vmem [resolvable:$true] %s38
      %44 = dma.hbm_to_vmem [thread:$0]  %s4, 2048, %s39, [#allocation5], 128, 128, 8
    $region21: #{_lambda_.1} parent=1 // pred_fallthru
      _
    // Predicated region
    $region22: #{_lambda_.1} parent=1 // pred_check
      _
    $region23: #{_lambda_.1} parent=1 // pred_check_branch
      %46 = sbr.rel (0) target = $region25
    $region24: #{_lambda_.1} parent=1 // pred_region
      _
    $region25: #{_lambda_.1} parent=1 // pred_fallthru
      _
    // Predicated region
    $region26: #{_lambda_.1} parent=1 // pred_check
      _
    $region27: #{_lambda_.1} parent=1 // pred_check_branch
      %48 = sbr.rel (0) target = $region29
    $region28: #{_lambda_.1} parent=1 // pred_region
      %49 = dma.done [#allocation3], 16384
    $region29: #{_lambda_.1} parent=1 // pred_fallthru
      _
    // Predicated region
    $region30: #{_lambda_.1} parent=1 // pred_check
      _
    $region31: #{_lambda_.1} parent=1 // pred_check_branch
      %51 = sbr.rel (0) target = $region33
    $region32: #{_lambda_.1} parent=1 // pred_region
      %52 = dma.done [#allocation5], 2048
    $region33: #{_lambda_.1} parent=1 // pred_fallthru
      _
    %v53 = vld [vmem:[%s0] sm:$0xff]
    %v54 = vld [vmem:[%s1] sm:$0xff]
    %v55 = vld [vmem:[#allocation2] sm:$0xff]
    %v56 = vld [vmem:[#allocation2 + $0x8] sm:$0xff]
    %v57 = vld [vmem:[#allocation2 + $0x10] sm:$0xff]
    %v58 = vld [vmem:[#allocation2 + $0x18] sm:$0xff]
    %v59 = vld [vmem:[#allocation2 + $0x20] sm:$0xff]
    %v60 = vld [vmem:[#allocation2 + $0x28] sm:$0xff]
    %v61 = vld [vmem:[#allocation2 + $0x30] sm:$0xff]
    %v62 = vld [vmem:[#allocation2 + $0x38] sm:$0xff]
    %v63 = vld [vmem:[#allocation2 + $0x40] sm:$0xff]
    %v64 = vld [vmem:[#allocation2 + $0x48] sm:$0xff]
    %v65 = vld [vmem:[#allocation2 + $0x50] sm:$0xff]
    %v66 = vld [vmem:[#allocation2 + $0x58] sm:$0xff]
    %v67 = vld [vmem:[#allocation2 + $0x60] sm:$0xff]
    %v68 = vld [vmem:[#allocation2 + $0x68] sm:$0xff]
    %v69 = vld [vmem:[#allocation2 + $0x70] sm:$0xff]
    %v70 = vld [vmem:[#allocation2 + $0x78] sm:$0xff]
    %v71 = vld [vmem:[#allocation2 + $0x80] sm:$0xff]
    %v72 = vld [vmem:[#allocation2 + $0x88] sm:$0xff]
    %v73 = vld [vmem:[#allocation2 + $0x90] sm:$0xff]
    %v74 = vld [vmem:[#allocation2 + $0x98] sm:$0xff]
    %v75 = vld [vmem:[#allocation2 + $0xa0] sm:$0xff]
    %v76 = vld [vmem:[#allocation2 + $0xa8] sm:$0xff]
    %v77 = vld [vmem:[#allocation2 + $0xb0] sm:$0xff]
    %v78 = vld [vmem:[#allocation2 + $0xb8] sm:$0xff]
    %v79 = vld [vmem:[#allocation2 + $0xc0] sm:$0xff]
    %v80 = vld [vmem:[#allocation2 + $0xc8] sm:$0xff]
    %v81 = vld [vmem:[#allocation2 + $0xd0] sm:$0xff]
    %v82 = vld [vmem:[#allocation2 + $0xd8] sm:$0xff]
    %v83 = vld [vmem:[#allocation2 + $0xe0] sm:$0xff]
    %v84 = vld [vmem:[#allocation2 + $0xe8] sm:$0xff]
    %v85 = vld [vmem:[#allocation2 + $0xf0] sm:$0xff]
    %v86 = vld [vmem:[#allocation2 + $0xf8] sm:$0xff]
    %v87 = vld [vmem:[#allocation2 + $0x100] sm:$0xff]
    %v88 = vld [vmem:[#allocation2 + $0x108] sm:$0xff]
    %v89 = vld [vmem:[#allocation2 + $0x110] sm:$0xff]
    %v90 = vld [vmem:[#allocation2 + $0x118] sm:$0xff]
    %v91 = vld [vmem:[#allocation2 + $0x120] sm:$0xff]
    %v92 = vld [vmem:[#allocation2 + $0x128] sm:$0xff]
    %v93 = vld [vmem:[#allocation2 + $0x130] sm:$0xff]
    %v94 = vld [vmem:[#allocation2 + $0x138] sm:$0xff]
    %v95 = vld [vmem:[#allocation2 + $0x140] sm:$0xff]
    %v96 = vld [vmem:[#allocation2 + $0x148] sm:$0xff]
    %v97 = vld [vmem:[#allocation2 + $0x150] sm:$0xff]
    %v98 = vld [vmem:[#allocation2 + $0x158] sm:$0xff]
    %v99 = vld [vmem:[#allocation2 + $0x160] sm:$0xff]
    %v100 = vld [vmem:[#allocation2 + $0x168] sm:$0xff]
    %v101 = vld [vmem:[#allocation2 + $0x170] sm:$0xff]
    %v102 = vld [vmem:[#allocation2 + $0x178] sm:$0xff]
    %v103 = vld [vmem:[#allocation2 + $0x180] sm:$0xff]
    %v104 = vld [vmem:[#allocation2 + $0x188] sm:$0xff]
    %v105 = vld [vmem:[#allocation2 + $0x190] sm:$0xff]
    %v106 = vld [vmem:[#allocation2 + $0x198] sm:$0xff]
    %v107 = vld [vmem:[#allocation2 + $0x1a0] sm:$0xff]
    %v108 = vld [vmem:[#allocation2 + $0x1a8] sm:$0xff]
    %v109 = vld [vmem:[#allocation2 + $0x1b0] sm:$0xff]
    %v110 = vld [vmem:[#allocation2 + $0x1b8] sm:$0xff]
    %v111 = vld [vmem:[#allocation2 + $0x1c0] sm:$0xff]
    %v112 = vld [vmem:[#allocation2 + $0x1c8] sm:$0xff]
    %v113 = vld [vmem:[#allocation2 + $0x1d0] sm:$0xff]
    %v114 = vld [vmem:[#allocation2 + $0x1d8] sm:$0xff]
    %v115 = vld [vmem:[#allocation2 + $0x1e0] sm:$0xff]
    %v116 = vld [vmem:[#allocation2 + $0x1e8] sm:$0xff]
    %v117 = vld [vmem:[#allocation2 + $0x1f0] sm:$0xff]
    %v118 = vld [vmem:[#allocation2 + $0x1f8] sm:$0xff]
    %v119 = vld [vmem:[#allocation2 + $0x200] sm:$0xff]
    %v120 = vld [vmem:[#allocation2 + $0x208] sm:$0xff]
    %v121 = vld [vmem:[#allocation2 + $0x210] sm:$0xff]
    %v122 = vld [vmem:[#allocation2 + $0x218] sm:$0xff]
    %v123 = vld [vmem:[#allocation2 + $0x220] sm:$0xff]
    %v124 = vld [vmem:[#allocation2 + $0x228] sm:$0xff]
    %v125 = vld [vmem:[#allocation2 + $0x230] sm:$0xff]
    %v126 = vld [vmem:[#allocation2 + $0x238] sm:$0xff]
    %v127 = vld [vmem:[#allocation2 + $0x240] sm:$0xff]
    %v128 = vld [vmem:[#allocation2 + $0x248] sm:$0xff]
    %v129 = vld [vmem:[#allocation2 + $0x250] sm:$0xff]
    %v130 = vld [vmem:[#allocation2 + $0x258] sm:$0xff]
    %v131 = vld [vmem:[#allocation2 + $0x260] sm:$0xff]
    %v132 = vld [vmem:[#allocation2 + $0x268] sm:$0xff]
    %v133 = vld [vmem:[#allocation2 + $0x270] sm:$0xff]
    %v134 = vld [vmem:[#allocation2 + $0x278] sm:$0xff]
    %v135 = vld [vmem:[#allocation2 + $0x280] sm:$0xff]
    %v136 = vld [vmem:[#allocation2 + $0x288] sm:$0xff]
    %v137 = vld [vmem:[#allocation2 + $0x290] sm:$0xff]
    %v138 = vld [vmem:[#allocation2 + $0x298] sm:$0xff]
    %v139 = vld [vmem:[#allocation2 + $0x2a0] sm:$0xff]
    %v140 = vld [vmem:[#allocation2 + $0x2a8] sm:$0xff]
    %v141 = vld [vmem:[#allocation2 + $0x2b0] sm:$0xff]
    %v142 = vld [vmem:[#allocation2 + $0x2b8] sm:$0xff]
    %v143 = vld [vmem:[#allocation2 + $0x2c0] sm:$0xff]
    %v144 = vld [vmem:[#allocation2 + $0x2c8] sm:$0xff]
    %v145 = vld [vmem:[#allocation2 + $0x2d0] sm:$0xff]
    %v146 = vld [vmem:[#allocation2 + $0x2d8] sm:$0xff]
    %v147 = vld [vmem:[#allocation2 + $0x2e0] sm:$0xff]
    %v148 = vld [vmem:[#allocation2 + $0x2e8] sm:$0xff]
    %v149 = vld [vmem:[#allocation2 + $0x2f0] sm:$0xff]
    %v150 = vld [vmem:[#allocation2 + $0x2f8] sm:$0xff]
    %v151 = vld [vmem:[#allocation2 + $0x300] sm:$0xff]
    %v152 = vld [vmem:[#allocation2 + $0x308] sm:$0xff]
    %v153 = vld [vmem:[#allocation2 + $0x310] sm:$0xff]
    %v154 = vld [vmem:[#allocation2 + $0x318] sm:$0xff]
    %v155 = vld [vmem:[#allocation2 + $0x320] sm:$0xff]
    %v156 = vld [vmem:[#allocation2 + $0x328] sm:$0xff]
    %v157 = vld [vmem:[#allocation2 + $0x330] sm:$0xff]
    %v158 = vld [vmem:[#allocation2 + $0x338] sm:$0xff]
    %v159 = vld [vmem:[#allocation2 + $0x340] sm:$0xff]
    %v160 = vld [vmem:[#allocation2 + $0x348] sm:$0xff]
    %v161 = vld [vmem:[#allocation2 + $0x350] sm:$0xff]
    %v162 = vld [vmem:[#allocation2 + $0x358] sm:$0xff]
    %v163 = vld [vmem:[#allocation2 + $0x360] sm:$0xff]
    %v164 = vld [vmem:[#allocation2 + $0x368] sm:$0xff]
    %v165 = vld [vmem:[#allocation2 + $0x370] sm:$0xff]
    %v166 = vld [vmem:[#allocation2 + $0x378] sm:$0xff]
    %v167 = vld [vmem:[#allocation2 + $0x380] sm:$0xff]
    %v168 = vld [vmem:[#allocation2 + $0x388] sm:$0xff]
    %v169 = vld [vmem:[#allocation2 + $0x390] sm:$0xff]
    %v170 = vld [vmem:[#allocation2 + $0x398] sm:$0xff]
    %v171 = vld [vmem:[#allocation2 + $0x3a0] sm:$0xff]
    %v172 = vld [vmem:[#allocation2 + $0x3a8] sm:$0xff]
    %v173 = vld [vmem:[#allocation2 + $0x3b0] sm:$0xff]
    %v174 = vld [vmem:[#allocation2 + $0x3b8] sm:$0xff]
    %v175 = vld [vmem:[#allocation2 + $0x3c0] sm:$0xff]
    %v176 = vld [vmem:[#allocation2 + $0x3c8] sm:$0xff]
    %v177 = vld [vmem:[#allocation2 + $0x3d0] sm:$0xff]
    %v178 = vld [vmem:[#allocation2 + $0x3d8] sm:$0xff]
    %v179 = vld [vmem:[#allocation2 + $0x3e0] sm:$0xff]
    %v180 = vld [vmem:[#allocation2 + $0x3e8] sm:$0xff]
    %v181 = vld [vmem:[#allocation2 + $0x3f0] sm:$0xff]
    %v182 = vld [vmem:[#allocation2 + $0x3f8] sm:$0xff]
    %v183 = vld [vmem:[%s3] sm:$0xf]
    %v185 = vlaneseq
    %v186 = vshrl.u32 %v185, 7
    %v187 = vsub.s32 0, %v186
    %v188 = vrot.slane %v183, %v187
    %v189 = vlaneseq
    %v190 = vshrl.u32 %v189, 7
    %v191 = vsub.s32 1, %v190
    %v192 = vrot.slane %v183, %v191
    %v193 = vlaneseq
    %v194 = vshrl.u32 %v193, 7
    %v195 = vsub.s32 2, %v194
    %v196 = vrot.slane %v183, %v195
    %v197 = vlaneseq
    %v198 = vshrl.u32 %v197, 7
    %v199 = vsub.s32 3, %v198
    %v200 = vrot.slane %v183, %v199
    %205 = vmatprep.subr.mxu0 %v56
    %206 = vmatpush1.msra.mxu0 %v55
    %207 = vmatprep.subr.mxu0 %v60
    %208 = vmatpush1.msra.mxu0 %v59
    %209 = vmatprep.subr.mxu0 %v64
    %210 = vmatpush1.msra.mxu0 %v63
    %211 = vmatprep.subr.mxu0 %v68
    %212 = vmatpush1.msra.mxu0 %v67
    %213 = vmatprep.subr.mxu0 %v72
    %214 = vmatpush1.msra.mxu0 %v71
    %215 = vmatprep.subr.mxu0 %v76
    %216 = vmatpush1.msra.mxu0 %v75
    %217 = vmatprep.subr.mxu0 %v80
    %218 = vmatpush1.msra.mxu0 %v79
    %219 = vmatprep.subr.mxu0 %v84
    %220 = vmatpush1.msra.mxu0 %v83
    %221 = vmatprep.subr.mxu0 %v88
    %222 = vmatpush1.msra.mxu0 %v87
    %223 = vmatprep.subr.mxu0 %v92
    %224 = vmatpush1.msra.mxu0 %v91
    %225 = vmatprep.subr.mxu0 %v96
    %226 = vmatpush1.msra.mxu0 %v95
    %227 = vmatprep.subr.mxu0 %v100
    %228 = vmatpush1.msra.mxu0 %v99
    %229 = vmatprep.subr.mxu0 %v104
    %230 = vmatpush1.msra.mxu0 %v103
    %231 = vmatprep.subr.mxu0 %v108
    %232 = vmatpush1.msra.mxu0 %v107
    %233 = vmatprep.subr.mxu0 %v112
    %234 = vmatpush1.msra.mxu0 %v111
    %235 = vmatprep.subr.mxu0 %v116
    %236 = vmatpush1.msra.mxu0 %v115
    %237 = vmatprep.subr.mxu0 %v120
    %238 = vmatpush1.msra.mxu0 %v119
    %239 = vmatprep.subr.mxu0 %v124
    %240 = vmatpush1.msra.mxu0 %v123
    %241 = vmatprep.subr.mxu0 %v128
    %242 = vmatpush1.msra.mxu0 %v127
    %243 = vmatprep.subr.mxu0 %v132
    %244 = vmatpush1.msra.mxu0 %v131
    %245 = vmatprep.subr.mxu0 %v136
    %246 = vmatpush1.msra.mxu0 %v135
    %247 = vmatprep.subr.mxu0 %v140
    %248 = vmatpush1.msra.mxu0 %v139
    %249 = vmatprep.subr.mxu0 %v144
    %250 = vmatpush1.msra.mxu0 %v143
    %251 = vmatprep.subr.mxu0 %v148
    %252 = vmatpush1.msra.mxu0 %v147
    %253 = vmatprep.subr.mxu0 %v152
    %254 = vmatpush1.msra.mxu0 %v151
    %255 = vmatprep.subr.mxu0 %v156
    %256 = vmatpush1.msra.mxu0 %v155
    %257 = vmatprep.subr.mxu0 %v160
    %258 = vmatpush1.msra.mxu0 %v159
    %259 = vmatprep.subr.mxu0 %v164
    %260 = vmatpush1.msra.mxu0 %v163
    %261 = vmatprep.subr.mxu0 %v168
    %262 = vmatpush1.msra.mxu0 %v167
    %263 = vmatprep.subr.mxu0 %v172
    %264 = vmatpush1.msra.mxu0 %v171
    %265 = vmatprep.subr.mxu0 %v176
    %266 = vmatpush1.msra.mxu0 %v175
    %267 = vmatprep.subr.mxu0 %v180
    %268 = vmatpush1.msra.mxu0 %v179
    %269 = vmatprep.mubr.f32.mxu0 %v54
    %270 = vmatmul.mubr.f32.gmra.mrb[0].mxu0 %v53
    %v271 = vpop.f32.mrb[0].mxu0
    %v272 = vadd.f32 %v188, %v271
    %v273 = vpop.f32.mrb[0].mxu0
    %v274 = vadd.f32 %v192, %v273
    %275 = vdwg.mxu0
    %276 = vmatprep.subr.mxu0 %v58
    %277 = vmatpush1.msra.mxu0 %v57
    %278 = vmatprep.subr.mxu0 %v62
    %279 = vmatpush1.msra.mxu0 %v61
    %280 = vmatprep.subr.mxu0 %v66
    %281 = vmatpush1.msra.mxu0 %v65
    %282 = vmatprep.subr.mxu0 %v70
    %283 = vmatpush1.msra.mxu0 %v69
    %284 = vmatprep.subr.mxu0 %v74
    %285 = vmatpush1.msra.mxu0 %v73
    %286 = vmatprep.subr.mxu0 %v78
    %287 = vmatpush1.msra.mxu0 %v77
    %288 = vmatprep.subr.mxu0 %v82
    %289 = vmatpush1.msra.mxu0 %v81
    %290 = vmatprep.subr.mxu0 %v86
    %291 = vmatpush1.msra.mxu0 %v85
    %292 = vmatprep.subr.mxu0 %v90
    %293 = vmatpush1.msra.mxu0 %v89
    %294 = vmatprep.subr.mxu0 %v94
    %295 = vmatpush1.msra.mxu0 %v93
    %296 = vmatprep.subr.mxu0 %v98
    %297 = vmatpush1.msra.mxu0 %v97
    %298 = vmatprep.subr.mxu0 %v102
    %299 = vmatpush1.msra.mxu0 %v101
    %300 = vmatprep.subr.mxu0 %v106
    %301 = vmatpush1.msra.mxu0 %v105
    %302 = vmatprep.subr.mxu0 %v110
    %303 = vmatpush1.msra.mxu0 %v109
    %304 = vmatprep.subr.mxu0 %v114
    %305 = vmatpush1.msra.mxu0 %v113
    %306 = vmatprep.subr.mxu0 %v118
    %307 = vmatpush1.msra.mxu0 %v117
    %308 = vmatprep.subr.mxu0 %v122
    %309 = vmatpush1.msra.mxu0 %v121
    %310 = vmatprep.subr.mxu0 %v126
    %311 = vmatpush1.msra.mxu0 %v125
    %312 = vmatprep.subr.mxu0 %v130
    %313 = vmatpush1.msra.mxu0 %v129
    %314 = vmatprep.subr.mxu0 %v134
    %315 = vmatpush1.msra.mxu0 %v133
    %316 = vmatprep.subr.mxu0 %v138
    %317 = vmatpush1.msra.mxu0 %v137
    %318 = vmatprep.subr.mxu0 %v142
    %319 = vmatpush1.msra.mxu0 %v141
    %320 = vmatprep.subr.mxu0 %v146
    %321 = vmatpush1.msra.mxu0 %v145
    %322 = vmatprep.subr.mxu0 %v150
    %323 = vmatpush1.msra.mxu0 %v149
    %324 = vmatprep.subr.mxu0 %v154
    %325 = vmatpush1.msra.mxu0 %v153
    %326 = vmatprep.subr.mxu0 %v158
    %327 = vmatpush1.msra.mxu0 %v157
    %328 = vmatprep.subr.mxu0 %v162
    %329 = vmatpush1.msra.mxu0 %v161
    %330 = vmatprep.subr.mxu0 %v166
    %331 = vmatpush1.msra.mxu0 %v165
    %332 = vmatprep.subr.mxu0 %v170
    %333 = vmatpush1.msra.mxu0 %v169
    %334 = vmatprep.subr.mxu0 %v174
    %335 = vmatpush1.msra.mxu0 %v173
    %336 = vmatprep.subr.mxu0 %v178
    %337 = vmatpush1.msra.mxu0 %v177
    %338 = vmatprep.subr.mxu0 %v182
    %339 = vmatpush1.msra.mxu0 %v181
    %340 = vmatprep.mubr.f32.mxu0 %v54
    %341 = vmatmul.mubr.f32.gmra.mrb[0].mxu0 %v53
    %v342 = vpop.f32.mrb[0].mxu0
    %v343 = vadd.f32 %v196, %v342
    %v344 = vpop.f32.mrb[0].mxu0
    %v345 = vadd.f32 %v200, %v344
    %346 = vdwg.mxu0
    %v347 = vxor.u32 %v272, 2147483648
    %v348 = vmul.f32 %v347, 1.442695
    %v349 = vpow.pop %v348
    %v350 = vadd.f32 %v349, 1.0
    %v351 = vrcp.pop %v350
    %v352 = vmul.f32 1.0, %v351
    %v353 = vxor.u32 %v274, 2147483648
    %v354 = vmul.f32 %v353, 1.442695
    %v355 = vpow.pop %v354
    %v356 = vadd.f32 %v355, 1.0
    %v357 = vrcp.pop %v356
    %v358 = vmul.f32 1.0, %v357
    %v359 = vmul.f32 %v352, %v345
    %v360 = vadd.f32 %v343, %v359
    %v361 = vtanh.pop %v360
    %v362 = vsub.f32 1.0, %v358
    %v363 = vmul.f32 %v362, %v361
    %v364 = vmul.f32 %v358, %v54
    %v365 = vadd.f32 %v363, %v364
    %v366 = vld [vmem:[#allocation4] sm:$0xff]
    %v367 = vld [vmem:[#allocation4 + $0x8] sm:$0xff]
    %v368 = vld [vmem:[#allocation4 + $0x10] sm:$0xff]
    %v369 = vld [vmem:[#allocation4 + $0x18] sm:$0xff]
    %v370 = vld [vmem:[#allocation4 + $0x20] sm:$0xff]
    %v371 = vld [vmem:[#allocation4 + $0x28] sm:$0xff]
    %v372 = vld [vmem:[#allocation4 + $0x30] sm:$0xff]
    %v373 = vld [vmem:[#allocation4 + $0x38] sm:$0xff]
    %v374 = vld [vmem:[#allocation4 + $0x40] sm:$0xff]
    %v375 = vld [vmem:[#allocation4 + $0x48] sm:$0xff]
    %v376 = vld [vmem:[#allocation4 + $0x50] sm:$0xff]
    %v377 = vld [vmem:[#allocation4 + $0x58] sm:$0xff]
    %v378 = vld [vmem:[#allocation4 + $0x60] sm:$0xff]
    %v379 = vld [vmem:[#allocation4 + $0x68] sm:$0xff]
    %v380 = vld [vmem:[#allocation4 + $0x70] sm:$0xff]
    %v381 = vld [vmem:[#allocation4 + $0x78] sm:$0xff]
    %v382 = vld [vmem:[%s5] sm:$0x1]
    %v384 = vlaneseq
    %v385 = vshrl.u32 %v384, 7
    %v386 = vsub.s32 0, %v385
    %v387 = vrot.slane %v382, %v386
    %389 = vmatprep.subr.mxu0 0.0
    %390 = vmatpush1.msra.mxu0 %v366
    %391 = vmatprep.subr.mxu0 0.0
    %392 = vmatpush1.msra.mxu0 %v367
    %393 = vmatprep.subr.mxu0 0.0
    %394 = vmatpush1.msra.mxu0 %v368
    %395 = vmatprep.subr.mxu0 0.0
    %396 = vmatpush1.msra.mxu0 %v369
    %397 = vmatprep.subr.mxu0 0.0
    %398 = vmatpush1.msra.mxu0 %v370
    %399 = vmatprep.subr.mxu0 0.0
    %400 = vmatpush1.msra.mxu0 %v371
    %401 = vmatprep.subr.mxu0 0.0
    %402 = vmatpush1.msra.mxu0 %v372
    %403 = vmatprep.subr.mxu0 0.0
    %404 = vmatpush1.msra.mxu0 %v373
    %405 = vmatprep.subr.mxu0 0.0
    %406 = vmatpush1.msra.mxu0 %v374
    %407 = vmatprep.subr.mxu0 0.0
    %408 = vmatpush1.msra.mxu0 %v375
    %409 = vmatprep.subr.mxu0 0.0
    %410 = vmatpush1.msra.mxu0 %v376
    %411 = vmatprep.subr.mxu0 0.0
    %412 = vmatpush1.msra.mxu0 %v377
    %413 = vmatprep.subr.mxu0 0.0
    %414 = vmatpush1.msra.mxu0 %v378
    %415 = vmatprep.subr.mxu0 0.0
    %416 = vmatpush1.msra.mxu0 %v379
    %417 = vmatprep.subr.mxu0 0.0
    %418 = vmatpush1.msra.mxu0 %v380
    %419 = vmatprep.subr.mxu0 0.0
    %420 = vmatpush1.msra.mxu0 %v381
    %421 = vmatprep.subr.mxu0 0.0
    %422 = vmatpush1.msra.mxu0 0.0
    %423 = vmatprep.subr.mxu0 0.0
    %424 = vmatpush1.msra.mxu0 0.0
    %425 = vmatprep.subr.mxu0 0.0
    %426 = vmatpush1.msra.mxu0 0.0
    %427 = vmatprep.subr.mxu0 0.0
    %428 = vmatpush1.msra.mxu0 0.0
    %429 = vmatprep.subr.mxu0 0.0
    %430 = vmatpush1.msra.mxu0 0.0
    %431 = vmatprep.subr.mxu0 0.0
    %432 = vmatpush1.msra.mxu0 0.0
    %433 = vmatprep.subr.mxu0 0.0
    %434 = vmatpush1.msra.mxu0 0.0
    %435 = vmatprep.subr.mxu0 0.0
    %436 = vmatpush1.msra.mxu0 0.0
    %437 = vmatprep.subr.mxu0 0.0
    %438 = vmatpush1.msra.mxu0 0.0
    %439 = vmatprep.subr.mxu0 0.0
    %440 = vmatpush1.msra.mxu0 0.0
    %441 = vmatprep.subr.mxu0 0.0
    %442 = vmatpush1.msra.mxu0 0.0
    %443 = vmatprep.subr.mxu0 0.0
    %444 = vmatpush1.msra.mxu0 0.0
    %445 = vmatprep.subr.mxu0 0.0
    %446 = vmatpush1.msra.mxu0 0.0
    %447 = vmatprep.subr.mxu0 0.0
    %448 = vmatpush1.msra.mxu0 0.0
    %449 = vmatprep.subr.mxu0 0.0
    %450 = vmatpush1.msra.mxu0 0.0
    %451 = vmatprep.subr.mxu0 0.0
    %452 = vmatpush1.msra.mxu0 0.0
    %453 = vmatprep.mubr.f32.mxu0 0.0
    %454 = vmatmul.mubr.f32.gmra.mrb[0].mxu0 %v365
    %v455 = vpop.f32.mrb[0].mxu0
    %v456 = vadd.f32 %v387, %v455
    %v457 = vpop.f32.mrb[0].mxu0
    %458 = vdwg.mxu0
    %v459 = vxor.u32 %v456, 2147483648
    %v460 = vmul.f32 %v459, 1.442695
    %v461 = vpow.pop %v460
    %v462 = vadd.f32 %v461, 1.0
    %v463 = vrcp.pop %v462
    %v464 = vmul.f32 1.0, %v463
    %465 = vst [vmem:[%s6] sm:$0xff] %v464
    %466 = vst [vmem:[%s7] sm:$0xff] %v365
    // Predicated region
    $region34: #{_lambda_.1} parent=1 // pred_check
      _
    $region35: #{_lambda_.1} parent=1 // pred_check_branch
      %468 = sbr.rel (0) target = $region37
    $region36: #{_lambda_.1} parent=1 // pred_region
      _
    $region37: #{_lambda_.1} parent=1 // pred_fallthru
      _
    // Predicated region
    $region38: #{_lambda_.1} parent=1 // pred_check
      _
    $region39: #{_lambda_.1} parent=1 // pred_check_branch
      %470 = sbr.rel (0) target = $region41
    $region40: #{_lambda_.1} parent=1 // pred_region
      _
    $region41: #{_lambda_.1} parent=1 // pred_fallthru
      _
    // Predicated region
    $region42: #{_lambda_.1} parent=1 // pred_check
      _
    $region43: #{_lambda_.1} parent=1 // pred_check_branch
      %472 = sbr.rel (0) target = $region45
    $region44: #{_lambda_.1} parent=1 // pred_region
      _
    $region45: #{_lambda_.1} parent=1 // pred_fallthru
      _
    // Predicated region
    $region46: #{_lambda_.1} parent=1 // pred_check
      _
    $region47: #{_lambda_.1} parent=1 // pred_check_branch
      %474 = sbr.rel (0) target = $region49
    $region48: #{_lambda_.1} parent=1 // pred_region
      _
    $region49: #{_lambda_.1} parent=1 // pred_fallthru
      _
    %475 = vsyncpa [#allocation3], 1
    %476 = vsyncpa [#allocation5], 1

</llo_original>
